<compile_context>
chip_gen: v7x
topology: tpu7x:2x2x1
jax: 0.10.0
libtpu: 0.0.40
codegen_flags: <defaults>
</compile_context>

<pallas_src>
import numpy as np
import jax
import jax.numpy as jnp
from jax.experimental import pallas as pl
from jax.experimental.pallas import tpu as pltpu

# --- configuration (the PyTorch script's module-level globals) -------------
N_FINGERPRINT = 32
DIM = 32
HIDDEN_LAYER = 2
OUTPUT_LAYER = 2
UPDATE = "sum"     # 'sum' | 'mean'   (xs + A@hs   vs   xs + A@hs/(M-1))
OUTPUT = "sum"     # 'sum' | 'mean'   (per-molecule node sum vs mean)

# --- tiling constants -------------------------------------------------------
P_NODE = 8                     # node slots per molecule (sublane aligned)
TILE_MOLS = 16                 # molecules per grid step
TILE_NODES = TILE_MOLS * P_NODE  # 128 nodes per grid step (lane aligned)
PROP_PAD = 128                 # lane-dense padded width of the property head


# --- Pallas kernel body ------------------------------------------------------
def _gnn_body(emb_ref, a_ref, s_ref, scale_ref,
              wall_ref, ball_ref, wprop_ref, bprop_ref, out_ref):
    xs = emb_ref[...]            # (TILE_NODES, DIM) f32 node features of this tile
    a = a_ref[...]               # (TILE_NODES, TILE_NODES) bf16, block-diag inside tile

    # GNN updates: hs = relu(W_fp[i] xs + b);  xs += A @ hs [ * 1/(M-1) ]
    for i in range(HIDDEN_LAYER):
        hs = jnp.maximum(
            jnp.dot(xs.astype(jnp.bfloat16), wall_ref[i],
                    preferred_element_type=jnp.float32) + ball_ref[i],
            0.0)
        nbr = jnp.dot(a, hs.astype(jnp.bfloat16),
                      preferred_element_type=jnp.float32)
        if UPDATE == "sum":
            xs = xs + nbr                      # scale==1 folded out at trace time
        else:  # 'mean'
            xs = xs + nbr * scale_ref[...]     # per-node 1/(M-1)

    # Per-molecule aggregation (sum/mean over real nodes) as a matmul.
    mv = jnp.dot(s_ref[...], xs.astype(jnp.bfloat16),
                 preferred_element_type=jnp.float32)       # (TILE_MOLS, DIM)

    # Output MLP.
    for j in range(OUTPUT_LAYER):
        mv = jnp.maximum(
            jnp.dot(mv.astype(jnp.bfloat16), wall_ref[HIDDEN_LAYER + j],
                    preferred_element_type=jnp.float32) + ball_ref[HIDDEN_LAYER + j],
            0.0)

    # Property head -> lane-dense (TILE_MOLS, 128); cols >= 2 are exact zeros.
    out_ref[...] = (jnp.dot(mv.astype(jnp.bfloat16), wprop_ref[...],
                            preferred_element_type=jnp.float32) + bprop_ref[...])


if UPDATE == "mean":
    def gnn_kernel(emb_ref, a_ref, s_ref, scale_ref,
                   wall_ref, ball_ref, wprop_ref, bprop_ref, out_ref):
        _gnn_body(emb_ref, a_ref, s_ref, scale_ref,
                  wall_ref, ball_ref, wprop_ref, bprop_ref, out_ref)
else:
    def gnn_kernel(emb_ref, a_ref, s_ref,
                   wall_ref, ball_ref, wprop_ref, bprop_ref, out_ref):
        _gnn_body(emb_ref, a_ref, s_ref, None,
                  wall_ref, ball_ref, wprop_ref, bprop_ref, out_ref)


# --- wrapper ----------------------------------------------------------------
def gnn_forward(emb_pad, A_pad, S_pad, scale_pad, Wall, ball, Wprop_pad, bprop_pad):
    n_pad, dim = emb_pad.shape
    n_groups = n_pad // TILE_NODES
    n_mols_pad = S_pad.shape[0]

    # bf16 MXU inputs (A is 0/1: exact; weights/S tolerate bf16); accumulate f32 in-kernel.
    A_bf = A_pad.astype(jnp.bfloat16)
    S_bf = S_pad.astype(jnp.bfloat16)
    Wall_bf = Wall.astype(jnp.bfloat16)
    Wprop_bf = Wprop_pad.astype(jnp.bfloat16)

    in_specs = [
        pl.BlockSpec((TILE_NODES, dim), lambda g: (g, 0)),          # node features
        pl.BlockSpec((TILE_NODES, TILE_NODES), lambda g: (g, 0)),   # adjacency row-block
        pl.BlockSpec((TILE_MOLS, TILE_NODES), lambda g: (g, 0)),    # aggregation weights
    ]
    args = [emb_pad, A_bf, S_bf]
    if UPDATE == "mean":
        in_specs.append(pl.BlockSpec((TILE_NODES, 1), lambda g: (g, 0)))
        args.append(scale_pad)

    # Packed weights: constant index_map -> stay resident in VMEM across grid steps.
    in_specs += [
        pl.BlockSpec(Wall_bf.shape, lambda g: (0, 0, 0)),
        pl.BlockSpec(ball.shape, lambda g: (0, 0, 0)),
        pl.BlockSpec(Wprop_bf.shape, lambda g: (0, 0)),
        pl.BlockSpec(bprop_pad.shape, lambda g: (0, 0)),
    ]
    args += [Wall_bf, ball, Wprop_bf, bprop_pad]

    return pl.pallas_call(
        gnn_kernel,
        out_shape=jax.ShapeDtypeStruct((n_mols_pad, PROP_PAD), jnp.float32),
        grid=(n_groups,),
        in_specs=in_specs,
        out_specs=pl.BlockSpec((TILE_MOLS, PROP_PAD), lambda g: (g, 0)),
        compiler_params=pltpu.CompilerParams(
            dimension_semantics=("parallel",),        # tiles are independent molecules
            vmem_limit_bytes=32 * 1024 * 1024),       # explicit, safe on v5e/v6e/v7x
    )(*args)


# --- pure-JAX reference (original dense flat layout, f32) --------------------
def reference(emb_flat, A_dense, S_dense, scale_dense, Wfp, bfp, Wout, bout, Wprop, bprop):
    xs = emb_flat
    for i in range(HIDDEN_LAYER):
        hs = jax.nn.relu(xs @ Wfp[i] + bfp[i])
        upd = A_dense @ hs
        xs = xs + (upd if UPDATE == "sum" else upd * scale_dense)
    mv = S_dense @ xs
    for j in range(OUTPUT_LAYER):
        mv = jax.nn.relu(mv @ Wout[j] + bout[j])
    return mv @ Wprop + bprop


if __name__ == "__main__":
    key = jax.random.PRNGKey(0)
    k_emb, k_wfp, k_bfp, k_wout, k_bout, k_wprop, k_bprop, k_fp = jax.random.split(key, 8)

    # ---- synthetic batch --------------------------------------------------
    n_mols = 20
    rng = np.random.RandomState(0)
    sizes = [int(rng.randint(2, P_NODE + 1)) for _ in range(n_mols)]  # 2..8 nodes/mol
    N = int(sum(sizes))

    bound = 1.0 / np.sqrt(DIM)
    emb_table = jax.random.normal(k_emb, (N_FINGERPRINT, DIM), jnp.float32)
    Wfp = jax.random.uniform(k_wfp, (HIDDEN_LAYER, DIM, DIM), jnp.float32, -bound, bound)
    bfp = jax.random.uniform(k_bfp, (HIDDEN_LAYER, 1, DIM), jnp.float32, -bound, bound)
    Wout = jax.random.uniform(k_wout, (OUTPUT_LAYER, DIM, DIM), jnp.float32, -bound, bound)
    bout = jax.random.uniform(k_bout, (OUTPUT_LAYER, 1, DIM), jnp.float32, -bound, bound)
    Wprop = jax.random.uniform(k_wprop, (DIM, 2), jnp.float32, -bound, bound)
    bprop = jax.random.uniform(k_bprop, (1, 2), jnp.float32, -bound, bound)

    # fingerprints + symmetric 0/1 adjacencies (host glue, matches forward())
    fp_cat = jax.random.randint(k_fp, (N,), 0, N_FINGERPRINT)          # torch.cat(fingerprints)
    emb_flat = np.asarray(emb_table)[np.asarray(fp_cat)]               # embed_fingerprint(...)
    adjs = []
    for s in sizes:
        a = (rng.rand(s, s) > 0.5).astype(np.float32)
        a = np.maximum(a, a.T)
        np.fill_diagonal(a, 0.0)
        adjs.append(a)

    # ---- pack molecules into node tiles (block-diagonal, no dense NxN) ----
    n_groups = -(-n_mols // TILE_MOLS)
    n_mols_pad = n_groups * TILE_MOLS
    N_pad = n_groups * TILE_NODES

    emb_pad = np.zeros((N_pad, DIM), np.float32)
    A_pad = np.zeros((N_pad, TILE_NODES), np.float32)      # row block per tile, block-diag inside
    S_pad = np.zeros((n_mols_pad, TILE_NODES), np.float32)  # per-tile aggregation weights
    scale_pad = np.ones((N_pad, 1), np.float32)

    node_off = np.concatenate([[0], np.cumsum(sizes)]).astype(int)
    for m, (s, a) in enumerate(zip(sizes, adjs)):
        g, lm = divmod(m, TILE_MOLS)
        row0 = g * TILE_NODES + lm * P_NODE     # global padded node base of molecule m
        col0 = lm * P_NODE                      # local (within-tile) node base
        emb_pad[row0:row0 + s] = emb_flat[node_off[m]:node_off[m] + s]
        A_pad[row0:row0 + s, col0:col0 + s] = a
        S_pad[m, col0:col0 + s] = 1.0 if OUTPUT == "sum" else 1.0 / s
        if UPDATE == "mean":
            scale_pad[row0:row0 + s, 0] = 1.0 / max(s - 1, 1)   # guard single-node molecules

    # packed weights (fewer DMAs); property head padded to 128 lane-dense columns
    Wall = jnp.concatenate([Wfp, Wout], axis=0)                 # (H+O, DIM, DIM)
    ball = jnp.concatenate([bfp, bout], axis=0)                 # (H+O, 1, DIM), stays f32
    Wprop_pad = np.zeros((DIM, PROP_PAD), np.float32); Wprop_pad[:, :2] = np.asarray(Wprop)
    bprop_pad = np.zeros((1, PROP_PAD), np.float32);   bprop_pad[:, :2] = np.asarray(bprop)

    # ---- run kernel --------------------------------------------------------
    out_pad = gnn_forward(jnp.asarray(emb_pad), jnp.asarray(A_pad), jnp.asarray(S_pad),
                          jnp.asarray(scale_pad), Wall, ball,
                          jnp.asarray(Wprop_pad), jnp.asarray(bprop_pad))
    out_pad = jax.block_until_ready(out_pad)
    props = np.asarray(out_pad)[:n_mols, :2]

    # ---- reference on the original dense flat layout -----------------------
    A_dense = np.zeros((N, N), np.float32)
    S_dense = np.zeros((n_mols, N), np.float32)
    Mvec = np.concatenate([np.repeat(s, s) for s in sizes]).astype(np.float32)[:, None]
    off = 0
    for m, s in enumerate(sizes):
        A_dense[off:off + s, off:off + s] = adjs[m]
        S_dense[m, off:off + s] = 1.0 if OUTPUT == "sum" else 1.0 / s
        off += s
    scale_dense = (np.ones((N, 1), np.float32) if UPDATE == "sum"
                   else (1.0 / np.maximum(Mvec - 1.0, 1.0)).astype(np.float32))

    ref = reference(jnp.asarray(emb_flat), jnp.asarray(A_dense), jnp.asarray(S_dense),
                    jnp.asarray(scale_dense), Wfp, bfp, Wout, bout, Wprop, bprop)

    np.testing.assert_allclose(props, np.asarray(ref), rtol=5e-2, atol=5e-2)
    assert props.shape == (n_mols, 2) and np.all(np.isfinite(props))
    print("KERNEL_OK")
</pallas_src>

<mosaic_0001>
module attributes {stable_mosaic.version = 11 : i64} {
  func.func @gnn_kernel(%arg0: i32, %arg1: memref<128x32xf32, #tpu.memory_space<vmem>>, %arg2: memref<128x128xbf16, #tpu.memory_space<vmem>>, %arg3: memref<16x128xbf16, #tpu.memory_space<vmem>>, %arg4: memref<4x32x32xbf16, #tpu.memory_space<vmem>>, %arg5: memref<4x1x32xf32, #tpu.memory_space<vmem>>, %arg6: memref<32x128xbf16, #tpu.memory_space<vmem>>, %arg7: memref<1x128xf32, #tpu.memory_space<vmem>>, %arg8: memref<16x128xf32, #tpu.memory_space<vmem>>) attributes {dimension_semantics = [#tpu.dimension_semantics<parallel>], iteration_bounds = array<i64: 2>, scalar_prefetch = 0 : i64, scratch_operands = 0 : i64, tpu.core_type = #tpu.core_type<tc>, window_params = [{transform_indices = @transform_0, window_bounds = array<i64: 128, 32>}, {transform_indices = @transform_1, window_bounds = array<i64: 128, 128>}, {transform_indices = @transform_2, window_bounds = array<i64: 16, 128>}, {pipeline_mode = #tpu.pipeline_mode<synchronous>, transform_indices = @transform_3, window_bounds = array<i64: 4, 32, 32>}, {pipeline_mode = #tpu.pipeline_mode<synchronous>, transform_indices = @transform_4, window_bounds = array<i64: 4, 1, 32>}, {pipeline_mode = #tpu.pipeline_mode<synchronous>, transform_indices = @transform_5, window_bounds = array<i64: 32, 128>}, {pipeline_mode = #tpu.pipeline_mode<synchronous>, transform_indices = @transform_6, window_bounds = array<i64: 1, 128>}, {transform_indices = @transform_7, window_bounds = array<i64: 16, 128>}]} {
    %c0 = arith.constant 0 : index
    %c0_0 = arith.constant 0 : index
    %0 = vector.load %arg1[%c0, %c0_0] : memref<128x32xf32, #tpu.memory_space<vmem>>, vector<128x32xf32>
    %c0_1 = arith.constant 0 : index
    %c0_2 = arith.constant 0 : index
    %1 = vector.load %arg2[%c0_1, %c0_2] : memref<128x128xbf16, #tpu.memory_space<vmem>>, vector<128x128xbf16>
    %2 = arith.truncf %0 : vector<128x32xf32> to vector<128x32xbf16>
    %c0_3 = arith.constant 0 : index
    %c0_4 = arith.constant 0 : index
    %c0_5 = arith.constant 0 : index
    %3 = vector.load %arg4[%c0_3, %c0_4, %c0_5] : memref<4x32x32xbf16, #tpu.memory_space<vmem>>, vector<1x32x32xbf16>
    %4 = vector.shape_cast %3 : vector<1x32x32xbf16> to vector<32x32xbf16>
    %cst = arith.constant dense<0.000000e+00> : vector<128x32xf32>
    %5 = tpu.matmul %2, %4, %cst {dimension_numbers = #tpu.dot_dimension_numbers<[1], [0], [0], [1], [0, 0, 1, 1], [], []>} : vector<128x32xbf16>, vector<32x32xbf16>, vector<128x32xf32> -> vector<128x32xf32>
    %c0_6 = arith.constant 0 : index
    %c0_7 = arith.constant 0 : index
    %c0_8 = arith.constant 0 : index
    %6 = vector.load %arg5[%c0_6, %c0_7, %c0_8] : memref<4x1x32xf32, #tpu.memory_space<vmem>>, vector<1x1x32xf32>
    %7 = vector.shape_cast %6 : vector<1x1x32xf32> to vector<1x32xf32>
    %8 = vector.broadcast %7 : vector<1x32xf32> to vector<128x32xf32>
    %9 = arith.addf %5, %8 : vector<128x32xf32>
    %cst_9 = arith.constant 0.000000e+00 : f32
    %10 = vector.broadcast %cst_9 : f32 to vector<128x32xf32>
    %11 = arith.maximumf %9, %10 : vector<128x32xf32>
    %12 = arith.truncf %11 : vector<128x32xf32> to vector<128x32xbf16>
    %cst_10 = arith.constant dense<0.000000e+00> : vector<128x32xf32>
    %13 = tpu.matmul %1, %12, %cst_10 {dimension_numbers = #tpu.dot_dimension_numbers<[1], [0], [0], [1], [0, 0, 1, 1], [], []>} : vector<128x128xbf16>, vector<128x32xbf16>, vector<128x32xf32> -> vector<128x32xf32>
    %14 = arith.addf %0, %13 : vector<128x32xf32>
    %15 = arith.truncf %14 : vector<128x32xf32> to vector<128x32xbf16>
    %c1 = arith.constant 1 : index
    %c0_11 = arith.constant 0 : index
    %c0_12 = arith.constant 0 : index
    %16 = vector.load %arg4[%c1, %c0_11, %c0_12] : memref<4x32x32xbf16, #tpu.memory_space<vmem>>, vector<1x32x32xbf16>
    %17 = vector.shape_cast %16 : vector<1x32x32xbf16> to vector<32x32xbf16>
    %cst_13 = arith.constant dense<0.000000e+00> : vector<128x32xf32>
    %18 = tpu.matmul %15, %17, %cst_13 {dimension_numbers = #tpu.dot_dimension_numbers<[1], [0], [0], [1], [0, 0, 1, 1], [], []>} : vector<128x32xbf16>, vector<32x32xbf16>, vector<128x32xf32> -> vector<128x32xf32>
    %c1_14 = arith.constant 1 : index
    %c0_15 = arith.constant 0 : index
    %c0_16 = arith.constant 0 : index
    %19 = vector.load %arg5[%c1_14, %c0_15, %c0_16] : memref<4x1x32xf32, #tpu.memory_space<vmem>>, vector<1x1x32xf32>
    %20 = vector.shape_cast %19 : vector<1x1x32xf32> to vector<1x32xf32>
    %21 = vector.broadcast %20 : vector<1x32xf32> to vector<128x32xf32>
    %22 = arith.addf %18, %21 : vector<128x32xf32>
    %cst_17 = arith.constant 0.000000e+00 : f32
    %23 = vector.broadcast %cst_17 : f32 to vector<128x32xf32>
    %24 = arith.maximumf %22, %23 : vector<128x32xf32>
    %25 = arith.truncf %24 : vector<128x32xf32> to vector<128x32xbf16>
    %cst_18 = arith.constant dense<0.000000e+00> : vector<128x32xf32>
    %26 = tpu.matmul %1, %25, %cst_18 {dimension_numbers = #tpu.dot_dimension_numbers<[1], [0], [0], [1], [0, 0, 1, 1], [], []>} : vector<128x128xbf16>, vector<128x32xbf16>, vector<128x32xf32> -> vector<128x32xf32>
    %27 = arith.addf %14, %26 : vector<128x32xf32>
    %c0_19 = arith.constant 0 : index
    %c0_20 = arith.constant 0 : index
    %28 = vector.load %arg3[%c0_19, %c0_20] : memref<16x128xbf16, #tpu.memory_space<vmem>>, vector<16x128xbf16>
    %29 = arith.truncf %27 : vector<128x32xf32> to vector<128x32xbf16>
    %cst_21 = arith.constant dense<0.000000e+00> : vector<16x32xf32>
    %30 = tpu.matmul %28, %29, %cst_21 {dimension_numbers = #tpu.dot_dimension_numbers<[1], [0], [0], [1], [0, 0, 1, 1], [], []>} : vector<16x128xbf16>, vector<128x32xbf16>, vector<16x32xf32> -> vector<16x32xf32>
    %31 = arith.truncf %30 : vector<16x32xf32> to vector<16x32xbf16>
    %c2 = arith.constant 2 : index
    %c0_22 = arith.constant 0 : index
    %c0_23 = arith.constant 0 : index
    %32 = vector.load %arg4[%c2, %c0_22, %c0_23] : memref<4x32x32xbf16, #tpu.memory_space<vmem>>, vector<1x32x32xbf16>
    %33 = vector.shape_cast %32 : vector<1x32x32xbf16> to vector<32x32xbf16>
    %cst_24 = arith.constant dense<0.000000e+00> : vector<16x32xf32>
    %34 = tpu.matmul %31, %33, %cst_24 {dimension_numbers = #tpu.dot_dimension_numbers<[1], [0], [0], [1], [0, 0, 1, 1], [], []>} : vector<16x32xbf16>, vector<32x32xbf16>, vector<16x32xf32> -> vector<16x32xf32>
    %c2_25 = arith.constant 2 : index
    %c0_26 = arith.constant 0 : index
    %c0_27 = arith.constant 0 : index
    %35 = vector.load %arg5[%c2_25, %c0_26, %c0_27] : memref<4x1x32xf32, #tpu.memory_space<vmem>>, vector<1x1x32xf32>
    %36 = vector.shape_cast %35 : vector<1x1x32xf32> to vector<1x32xf32>
    %37 = vector.broadcast %36 : vector<1x32xf32> to vector<16x32xf32>
    %38 = arith.addf %34, %37 : vector<16x32xf32>
    %cst_28 = arith.constant 0.000000e+00 : f32
    %39 = vector.broadcast %cst_28 : f32 to vector<16x32xf32>
    %40 = arith.maximumf %38, %39 : vector<16x32xf32>
    %41 = arith.truncf %40 : vector<16x32xf32> to vector<16x32xbf16>
    %c3 = arith.constant 3 : index
    %c0_29 = arith.constant 0 : index
    %c0_30 = arith.constant 0 : index
    %42 = vector.load %arg4[%c3, %c0_29, %c0_30] : memref<4x32x32xbf16, #tpu.memory_space<vmem>>, vector<1x32x32xbf16>
    %43 = vector.shape_cast %42 : vector<1x32x32xbf16> to vector<32x32xbf16>
    %cst_31 = arith.constant dense<0.000000e+00> : vector<16x32xf32>
    %44 = tpu.matmul %41, %43, %cst_31 {dimension_numbers = #tpu.dot_dimension_numbers<[1], [0], [0], [1], [0, 0, 1, 1], [], []>} : vector<16x32xbf16>, vector<32x32xbf16>, vector<16x32xf32> -> vector<16x32xf32>
    %c3_32 = arith.constant 3 : index
    %c0_33 = arith.constant 0 : index
    %c0_34 = arith.constant 0 : index
    %45 = vector.load %arg5[%c3_32, %c0_33, %c0_34] : memref<4x1x32xf32, #tpu.memory_space<vmem>>, vector<1x1x32xf32>
    %46 = vector.shape_cast %45 : vector<1x1x32xf32> to vector<1x32xf32>
    %47 = vector.broadcast %46 : vector<1x32xf32> to vector<16x32xf32>
    %48 = arith.addf %44, %47 : vector<16x32xf32>
    %cst_35 = arith.constant 0.000000e+00 : f32
    %49 = vector.broadcast %cst_35 : f32 to vector<16x32xf32>
    %50 = arith.maximumf %48, %49 : vector<16x32xf32>
    %51 = arith.truncf %50 : vector<16x32xf32> to vector<16x32xbf16>
    %c0_36 = arith.constant 0 : index
    %c0_37 = arith.constant 0 : index
    %52 = vector.load %arg6[%c0_36, %c0_37] : memref<32x128xbf16, #tpu.memory_space<vmem>>, vector<32x128xbf16>
    %cst_38 = arith.constant dense<0.000000e+00> : vector<16x128xf32>
    %53 = tpu.matmul %51, %52, %cst_38 {dimension_numbers = #tpu.dot_dimension_numbers<[1], [0], [0], [1], [0, 0, 1, 1], [], []>} : vector<16x32xbf16>, vector<32x128xbf16>, vector<16x128xf32> -> vector<16x128xf32>
    %c0_39 = arith.constant 0 : index
    %c0_40 = arith.constant 0 : index
    %54 = vector.load %arg7[%c0_39, %c0_40] : memref<1x128xf32, #tpu.memory_space<vmem>>, vector<1x128xf32>
    %55 = vector.broadcast %54 : vector<1x128xf32> to vector<16x128xf32>
    %56 = arith.addf %53, %55 : vector<16x128xf32>
    %c0_41 = arith.constant 0 : index
    %c0_42 = arith.constant 0 : index
    %57 = vector.load %arg8[%c0_41, %c0_42] : memref<16x128xf32, #tpu.memory_space<vmem>>, vector<16x128xf32>
    tpu.vector_store %arg8[%c0_41, %c0_42], %56 {strides = array<i32>} : memref<16x128xf32, #tpu.memory_space<vmem>>, vector<16x128xf32>,
    return
  }
  func.func @transform_0(%arg0: i32) -> (i32, i32) {
    %c0_i32 = arith.constant 0 : i32
    %c0_i32_0 = arith.constant 0 : i32
    return %arg0, %c0_i32 : i32, i32
  }
  func.func @transform_1(%arg0: i32) -> (i32, i32) {
    %c0_i32 = arith.constant 0 : i32
    %c0_i32_0 = arith.constant 0 : i32
    return %arg0, %c0_i32 : i32, i32
  }
  func.func @transform_2(%arg0: i32) -> (i32, i32) {
    %c0_i32 = arith.constant 0 : i32
    %c0_i32_0 = arith.constant 0 : i32
    return %arg0, %c0_i32 : i32, i32
  }
  func.func @transform_3(%arg0: i32) -> (i32, i32, i32) {
    %c0_i32 = arith.constant 0 : i32
    %c0_i32_0 = arith.constant 0 : i32
    %c0_i32_1 = arith.constant 0 : i32
    %c0_i32_2 = arith.constant 0 : i32
    return %c0_i32, %c0_i32_0, %c0_i32_1 : i32, i32, i32
  }
  func.func @transform_4(%arg0: i32) -> (i32, i32, i32) {
    %c0_i32 = arith.constant 0 : i32
    %c0_i32_0 = arith.constant 0 : i32
    %c0_i32_1 = arith.constant 0 : i32
    %c0_i32_2 = arith.constant 0 : i32
    return %c0_i32, %c0_i32_0, %c0_i32_1 : i32, i32, i32
  }
  func.func @transform_5(%arg0: i32) -> (i32, i32) {
    %c0_i32 = arith.constant 0 : i32
    %c0_i32_0 = arith.constant 0 : i32
    %c0_i32_1 = arith.constant 0 : i32
    return %c0_i32, %c0_i32_0 : i32, i32
  }
  func.func @transform_6(%arg0: i32) -> (i32, i32) {
    %c0_i32 = arith.constant 0 : i32
    %c0_i32_0 = arith.constant 0 : i32
    %c0_i32_1 = arith.constant 0 : i32
    return %c0_i32, %c0_i32_0 : i32, i32
  }
  func.func @transform_7(%arg0: i32) -> (i32, i32) {
    %c0_i32 = arith.constant 0 : i32
    %c0_i32_0 = arith.constant 0 : i32
    return %arg0, %c0_i32 : i32, i32
  }
}

</mosaic_0001>

<llo_original>
// kernel: tpu_custom_call.1
$region0: #{tpu_custom_call.1}
  #allocation0 [shape = 'u32[]', space=smem, size = 0x4, offset = 0x4, fixed_abs, tag = 'smem constant byte address 0x4 - core index']
  #allocation1 [shape = 'u32[144,128]{1,0:T(1,128)}', space=vmem, size = 0x12000, scoped, tag = 'internal scratch']
  %s0 = inlined_call_operand.vmem [shape: f32[256,32], index: 0, kind: input, shape index: {}]
  %s1 = inlined_call_operand.vmem [shape: bf16[256,128], index: 1, kind: input, shape index: {}]
  %s2 = inlined_call_operand.vmem [shape: bf16[32,128], index: 2, kind: input, shape index: {}]
  %s3 = inlined_call_operand.vmem [shape: bf16[4,32,32], index: 3, kind: input, shape index: {}]
  %s4 = inlined_call_operand.vmem [shape: f32[4,1,32], index: 4, kind: input, shape index: {}]
  %s5 = inlined_call_operand.vmem [shape: bf16[32,128], index: 5, kind: input, shape index: {}]
  %s6 = inlined_call_operand.vmem [shape: f32[1,128], index: 6, kind: input, shape index: {}]
  %s7 = inlined_call_operand.hbm [shape: f32[32,128], index: 7, kind: output, shape index: {}]
  %s8 = sld [smem:[#allocation0]]
  $region61: #{tpu_custom_call.1} parent=0
    _
  %s10 = ssub.s32 1, %s8
  %s11 = scalar_select 0, %s10, %s8
  $region1: #{tpu_custom_call.1} parent=0
    #allocation2 [shape = 'u8[16384]{0}', space=vmem, size = 0x4000, scoped, tag = 'output window, operand 0']
    #allocation3 [shape = 's32[2]{0}', space=sflag, size = 0x8, scoped, tag = 'scoped memory for tpu_custom_call.1']
    %12 = vsyncpa [#allocation3], 0
    %s13 = scalar_lea.sflag [#allocation3], 1
    %14 = vsyncpa %s13, 0
    loop: start=0, step=1, limit=4
    $region2: #{tpu_custom_call.1} parent=1 // loop_pre_header
      _
    $region3: #{tpu_custom_call.1} parent=1 // loop_header
      %s16 = sphi 0, %s20
      %p17 = scmp.ge.s32.totalorder %s16, 4
      %s26 = sphi 0, %s28
      %s29 = sphi 0, %s26
      %s30 = sphi 0, %s29
      %s46 = sphi 0, %s30
      %s52 = sphi 0, %s54
      %s55 = sphi 0, %s52
      %s56 = sphi 0, %s55
      %s72 = sphi 0, %s56
      %s78 = sphi 0, %s80
      %s81 = sphi 0, %s78
      %s82 = sphi 0, %s81
      %s98 = sphi 0, %s82
      %s102 = sphi 0, %s102
      %s104 = sphi 0, %s102
      %s105 = sphi 0, %s104
      %s119 = sphi 0, %s105
      %s123 = sphi 0, %s123
      %s125 = sphi 0, %s123
      %s126 = sphi 0, %s125
      %s140 = sphi 0, %s126
      %s144 = sphi 0, %s144
      %s146 = sphi 0, %s144
      %s147 = sphi 0, %s146
      %s161 = sphi 0, %s147
      %s165 = sphi 0, %s165
      %s167 = sphi 0, %s165
      %s168 = sphi 0, %s167
      %s182 = sphi 0, %s168
      %s188 = sphi 0, %s190
      %s191 = sphi 0, %s188
      %s192 = sphi 0, %s191
      %s208 = sphi 0, %s192
    $region4: #{tpu_custom_call.1} parent=1 // loop_header_branch
      %19 = sbr.rel (%p17) target = $region8
    $region5: #{tpu_custom_call.1} parent=1 // loop_body
      %s21 = ssub.s32 %s16, 1
      %s22 = ssub.s32 %s16, 2
      %s23 = sadd.s32 %s16, 1
      %s24 = ssub.s32 %s16, %s23
      %p25 = scmp.eq.s32.totalorder %s24, 0
      %s27 = sadd.s32 %s26, 1
      %s28 = scalar_select %p25, %s26, %s27
      %p31 = pneg %p25
      %p32 = scmp.eq.s32.totalorder %s16, 1
      %p33 = por %p31, %p32
      %p34 = scmp.ne.s32.totalorder %s26, %s29
      %p35 = scmp.eq.s32.totalorder %s16, 0
      %p36 = por %p34, %p35
      %p37 = scmp.ne.s32.totalorder %s26, %s29
      %p38 = scmp.eq.s32.totalorder %s21, 1
      %p39 = por %p37, %p38
      %p40 = scmp.ne.s32.totalorder %s29, %s30
      %p41 = scmp.eq.s32.totalorder %s21, 0
      %p42 = por %p40, %p41
      %p43 = scmp.ne.s32.totalorder %s29, %s30
      %p44 = scmp.eq.s32.totalorder %s22, 1
      %p45 = por %p43, %p44
      %p47 = scmp.ne.s32.totalorder %s30, %s46
      %p48 = scmp.eq.s32.totalorder %s22, 0
      %p49 = por %p47, %p48
      %s50 = ssub.s32 %s16, %s23
      %p51 = scmp.eq.s32.totalorder %s50, 0
      %s53 = sadd.s32 %s52, 1
      %s54 = scalar_select %p51, %s52, %s53
      %p57 = pneg %p51
      %p58 = scmp.eq.s32.totalorder %s16, 1
      %p59 = por %p57, %p58
      %p60 = scmp.ne.s32.totalorder %s52, %s55
      %p61 = scmp.eq.s32.totalorder %s16, 0
      %p62 = por %p60, %p61
      %p63 = scmp.ne.s32.totalorder %s52, %s55
      %p64 = scmp.eq.s32.totalorder %s21, 1
      %p65 = por %p63, %p64
      %p66 = scmp.ne.s32.totalorder %s55, %s56
      %p67 = scmp.eq.s32.totalorder %s21, 0
      %p68 = por %p66, %p67
      %p69 = scmp.ne.s32.totalorder %s55, %s56
      %p70 = scmp.eq.s32.totalorder %s22, 1
      %p71 = por %p69, %p70
      %p73 = scmp.ne.s32.totalorder %s56, %s72
      %p74 = scmp.eq.s32.totalorder %s22, 0
      %p75 = por %p73, %p74
      %s76 = ssub.s32 %s16, %s23
      %p77 = scmp.eq.s32.totalorder %s76, 0
      %s79 = sadd.s32 %s78, 1
      %s80 = scalar_select %p77, %s78, %s79
      %p83 = pneg %p77
      %p84 = scmp.eq.s32.totalorder %s16, 1
      %p85 = por %p83, %p84
      %p86 = scmp.ne.s32.totalorder %s78, %s81
      %p87 = scmp.eq.s32.totalorder %s16, 0
      %p88 = por %p86, %p87
      %p89 = scmp.ne.s32.totalorder %s78, %s81
      %p90 = scmp.eq.s32.totalorder %s21, 1
      %p91 = por %p89, %p90
      %p92 = scmp.ne.s32.totalorder %s81, %s82
      %p93 = scmp.eq.s32.totalorder %s21, 0
      %p94 = por %p92, %p93
      %p95 = scmp.ne.s32.totalorder %s81, %s82
      %p96 = scmp.eq.s32.totalorder %s22, 1
      %p97 = por %p95, %p96
      %p99 = scmp.ne.s32.totalorder %s82, %s98
      %p100 = scmp.eq.s32.totalorder %s22, 0
      %p101 = por %p99, %p100
      %s103 = sadd.s32 %s102, 1
      %p106 = scmp.eq.s32.totalorder %s16, 1
      %p107 = scmp.ne.s32.totalorder %s102, %s104
      %p108 = scmp.eq.s32.totalorder %s16, 0
      %p109 = por %p107, %p108
      %p110 = scmp.ne.s32.totalorder %s102, %s104
      %p111 = scmp.eq.s32.totalorder %s21, 1
      %p112 = por %p110, %p111
      %p113 = scmp.ne.s32.totalorder %s104, %s105
      %p114 = scmp.eq.s32.totalorder %s21, 0
      %p115 = por %p113, %p114
      %p116 = scmp.ne.s32.totalorder %s104, %s105
      %p117 = scmp.eq.s32.totalorder %s22, 1
      %p118 = por %p116, %p117
      %p120 = scmp.ne.s32.totalorder %s105, %s119
      %p121 = scmp.eq.s32.totalorder %s22, 0
      %p122 = por %p120, %p121
      %s124 = sadd.s32 %s123, 1
      %p127 = scmp.eq.s32.totalorder %s16, 1
      %p128 = scmp.ne.s32.totalorder %s123, %s125
      %p129 = scmp.eq.s32.totalorder %s16, 0
      %p130 = por %p128, %p129
      %p131 = scmp.ne.s32.totalorder %s123, %s125
      %p132 = scmp.eq.s32.totalorder %s21, 1
      %p133 = por %p131, %p132
      %p134 = scmp.ne.s32.totalorder %s125, %s126
      %p135 = scmp.eq.s32.totalorder %s21, 0
      %p136 = por %p134, %p135
      %p137 = scmp.ne.s32.totalorder %s125, %s126
      %p138 = scmp.eq.s32.totalorder %s22, 1
      %p139 = por %p137, %p138
      %p141 = scmp.ne.s32.totalorder %s126, %s140
      %p142 = scmp.eq.s32.totalorder %s22, 0
      %p143 = por %p141, %p142
      %s145 = sadd.s32 %s144, 1
      %p148 = scmp.eq.s32.totalorder %s16, 1
      %p149 = scmp.ne.s32.totalorder %s144, %s146
      %p150 = scmp.eq.s32.totalorder %s16, 0
      %p151 = por %p149, %p150
      %p152 = scmp.ne.s32.totalorder %s144, %s146
      %p153 = scmp.eq.s32.totalorder %s21, 1
      %p154 = por %p152, %p153
      %p155 = scmp.ne.s32.totalorder %s146, %s147
      %p156 = scmp.eq.s32.totalorder %s21, 0
      %p157 = por %p155, %p156
      %p158 = scmp.ne.s32.totalorder %s146, %s147
      %p159 = scmp.eq.s32.totalorder %s22, 1
      %p160 = por %p158, %p159
      %p162 = scmp.ne.s32.totalorder %s147, %s161
      %p163 = scmp.eq.s32.totalorder %s22, 0
      %p164 = por %p162, %p163
      %s166 = sadd.s32 %s165, 1
      %p169 = scmp.eq.s32.totalorder %s16, 1
      %p170 = scmp.ne.s32.totalorder %s165, %s167
      %p171 = scmp.eq.s32.totalorder %s16, 0
      %p172 = por %p170, %p171
      %p173 = scmp.ne.s32.totalorder %s165, %s167
      %p174 = scmp.eq.s32.totalorder %s21, 1
      %p175 = por %p173, %p174
      %p176 = scmp.ne.s32.totalorder %s167, %s168
      %p177 = scmp.eq.s32.totalorder %s21, 0
      %p178 = por %p176, %p177
      %p179 = scmp.ne.s32.totalorder %s167, %s168
      %p180 = scmp.eq.s32.totalorder %s22, 1
      %p181 = por %p179, %p180
      %p183 = scmp.ne.s32.totalorder %s168, %s182
      %p184 = scmp.eq.s32.totalorder %s22, 0
      %p185 = por %p183, %p184
      %s186 = ssub.s32 %s16, %s23
      %p187 = scmp.eq.s32.totalorder %s186, 0
      %s189 = sadd.s32 %s188, 1
      %s190 = scalar_select %p187, %s188, %s189
      %p193 = pneg %p187
      %p194 = scmp.eq.s32.totalorder %s16, 1
      %p195 = por %p193, %p194
      %p196 = scmp.ne.s32.totalorder %s188, %s191
      %p197 = scmp.eq.s32.totalorder %s16, 0
      %p198 = por %p196, %p197
      %p199 = scmp.ne.s32.totalorder %s188, %s191
      %p200 = scmp.eq.s32.totalorder %s21, 1
      %p201 = por %p199, %p200
      %p202 = scmp.ne.s32.totalorder %s191, %s192
      %p203 = scmp.eq.s32.totalorder %s21, 0
      %p204 = por %p202, %p203
      %p205 = scmp.ne.s32.totalorder %s191, %s192
      %p206 = scmp.eq.s32.totalorder %s22, 1
      %p207 = por %p205, %p206
      %p209 = scmp.ne.s32.totalorder %s192, %s208
      %p210 = scmp.eq.s32.totalorder %s22, 0
      %p211 = por %p209, %p210
      %p212 = scmp.le.s32.totalorder 1, %s16
      %p213 = scmp.lt.s32.totalorder %s16, 3
      %p214 = pnand %p212, %p213
      %p215 = pneg %p214
      // Predicated region
      $region9: #{tpu_custom_call.1} parent=5 // pred_check
        _
      $region10: #{tpu_custom_call.1} parent=5 // pred_check_branch
        %217 = sbr.rel (%p214) target = $region12
      $region11: #{tpu_custom_call.1} parent=5 // pred_region
        %s218 = ssub.s32 %s16, 1
        // Predicated region
        $region13: #{tpu_custom_call.1} parent=11 // pred_check
          %p219 = pneg %p115
        $region14: #{tpu_custom_call.1} parent=11 // pred_check_branch
          %221 = sbr.rel (%p219) target = $region16
        $region15: #{tpu_custom_call.1} parent=11 // pred_region
          _
        $region16: #{tpu_custom_call.1} parent=11 // pred_fallthru
          _
        // Predicated region
        $region17: #{tpu_custom_call.1} parent=11 // pred_check
          %p222 = pneg %p136
        $region18: #{tpu_custom_call.1} parent=11 // pred_check_branch
          %224 = sbr.rel (%p222) target = $region20
        $region19: #{tpu_custom_call.1} parent=11 // pred_region
          _
        $region20: #{tpu_custom_call.1} parent=11 // pred_fallthru
          _
        // Predicated region
        $region21: #{tpu_custom_call.1} parent=11 // pred_check
          %p225 = pneg %p157
        $region22: #{tpu_custom_call.1} parent=11 // pred_check_branch
          %227 = sbr.rel (%p225) target = $region24
        $region23: #{tpu_custom_call.1} parent=11 // pred_region
          _
        $region24: #{tpu_custom_call.1} parent=11 // pred_fallthru
          _
        // Predicated region
        $region25: #{tpu_custom_call.1} parent=11 // pred_check
          %p228 = pneg %p178
        $region26: #{tpu_custom_call.1} parent=11 // pred_check_branch
          %230 = sbr.rel (%p228) target = $region28
        $region27: #{tpu_custom_call.1} parent=11 // pred_region
          _
        $region28: #{tpu_custom_call.1} parent=11 // pred_fallthru
          _
      $region12: #{tpu_custom_call.1} parent=5 // pred_fallthru
        _
      %p231 = scmp.lt.s32.totalorder %s16, 2
      // Predicated region
      $region29: #{tpu_custom_call.1} parent=5 // pred_check
        %p232 = pneg %p231
      $region30: #{tpu_custom_call.1} parent=5 // pred_check_branch
        %234 = sbr.rel (%p232) target = $region32
      $region31: #{tpu_custom_call.1} parent=5 // pred_region
        // Predicated region
        $region33: #{tpu_custom_call.1} parent=31 // pred_check
          %p235 = pneg %p36
        $region34: #{tpu_custom_call.1} parent=31 // pred_check_branch
          %237 = sbr.rel (%p235) target = $region36
        $region35: #{tpu_custom_call.1} parent=31 // pred_region
          %s238 = smul.u32 16, %s16
          %p239 = scmp.lt.s32.totalorder %s238, 31
          %s240 = scalar_select %p239, %s238, 31
          %s241 = smul.addr %s240, 8
          %s242 = scalar_lea.vmem %s0, %s241
          %s243 = smul.u32 16, %s16
        $region36: #{tpu_custom_call.1} parent=31 // pred_fallthru
          _
        // Predicated region
        $region37: #{tpu_custom_call.1} parent=31 // pred_check
          %p244 = pneg %p62
        $region38: #{tpu_custom_call.1} parent=31 // pred_check_branch
          %246 = sbr.rel (%p244) target = $region40
        $region39: #{tpu_custom_call.1} parent=31 // pred_region
          %s247 = smul.u32 16, %s16
          %p248 = scmp.lt.s32.totalorder %s247, 31
          %s249 = scalar_select %p248, %s247, 31
          %s250 = smul.addr %s249, 4
          %s251 = scalar_lea.vmem %s1, %s250
          %s252 = smul.u32 16, %s16
        $region40: #{tpu_custom_call.1} parent=31 // pred_fallthru
          _
        // Predicated region
        $region41: #{tpu_custom_call.1} parent=31 // pred_check
          %p253 = pneg %p88
        $region42: #{tpu_custom_call.1} parent=31 // pred_check_branch
          %255 = sbr.rel (%p253) target = $region44
        $region43: #{tpu_custom_call.1} parent=31 // pred_region
          %s256 = smul.u32 2, %s16
          %p257 = scmp.lt.s32.totalorder %s256, 3
          %s258 = scalar_select %p257, %s256, 3
          %s259 = smul.addr %s258, 4
          %s260 = scalar_lea.vmem %s2, %s259
          %s261 = smul.u32 2, %s16
        $region44: #{tpu_custom_call.1} parent=31 // pred_fallthru
          _
      $region32: #{tpu_custom_call.1} parent=5 // pred_fallthru
        _
      %p262 = scmp.le.s32.totalorder 1, %s16
      %p263 = scmp.lt.s32.totalorder %s16, 3
      %p264 = pnand %p262, %p263
      %p265 = pneg %p264
      // Predicated region
      $region45: #{tpu_custom_call.1} parent=5 // pred_check
        _
      $region46: #{tpu_custom_call.1} parent=5 // pred_check_branch
        %267 = sbr.rel (%p264) target = $region48
      $region47: #{tpu_custom_call.1} parent=5 // pred_region
        %s268 = ssub.s32 %s16, 1
        %s269 = smul.u32 16, %s21
        %p270 = scmp.lt.s32.totalorder %s269, 31
        %s271 = scalar_select %p270, %s269, 31
        %s272 = smul.addr %s271, 8
        %s273 = scalar_lea.vmem %s0, %s272
        %p274 = pneg %p42
        %p275 = pneg %p39
        %s276 = smul.u32 16, %s21
        %p277 = scmp.lt.s32.totalorder %s276, 31
        %s278 = scalar_select %p277, %s276, 31
        %s279 = smul.addr %s278, 4
        %s280 = scalar_lea.vmem %s1, %s279
        %p281 = pneg %p68
        %p282 = pneg %p65
        %s283 = smul.u32 2, %s21
        %p284 = scmp.lt.s32.totalorder %s283, 3
        %s285 = scalar_select %p284, %s283, 3
        %s286 = smul.addr %s285, 4
        %s287 = scalar_lea.vmem %s2, %s286
        %p288 = pneg %p94
        %p289 = pneg %p91
        %p290 = pneg %p115
        %p291 = pneg %p112
        %p292 = pneg %p136
        %p293 = pneg %p133
        %p294 = pneg %p157
        %p295 = pneg %p154
        %p296 = pneg %p178
        %p297 = pneg %p175
        %p298 = pneg %p204
        %p299 = pneg %p201
        %s300 = sand.u32 %s191, 1
        %s301 = scalar_lea.sflag [#allocation3], %s300
        %s302 = sand.u32 %s191, 1
        %s303 = smul.addr %s302, 16
        %s304 = scalar_lea.vmem [#allocation2], %s303
        %s305 = smul.u32 16, %s21
        %p306 = scmp.lt.s32.totalorder %s305, 31
        %s307 = scalar_select %p306, %s305, 31
        %s308 = smul.addr %s307, 8
        %s309 = scalar_lea.vmem %s0, %s308
        %s310 = smul.u32 16, %s21
        %s311 = smul.u32 16, %s21
        %p312 = scmp.lt.s32.totalorder %s311, 31
        %s313 = scalar_select %p312, %s311, 31
        %s314 = smul.addr %s313, 4
        %s315 = scalar_lea.vmem %s1, %s314
        %s316 = smul.u32 16, %s21
        %s317 = smul.u32 2, %s21
        %p318 = scmp.lt.s32.totalorder %s317, 3
        %s319 = scalar_select %p318, %s317, 3
        %s320 = smul.addr %s319, 4
        %s321 = scalar_lea.vmem %s2, %s320
        %s322 = smul.u32 2, %s21
        %s323 = smul.u32 2, %s21
        %v325 = vld [vmem:[%s309] sm:$0xff]
        %v326 = vld [vmem:[%s309 + $0x8] sm:$0xff]
        %v327 = vld [vmem:[%s309 + $0x10] sm:$0xff]
        %v328 = vld [vmem:[%s309 + $0x18] sm:$0xff]
        %v329 = vld [vmem:[%s309 + $0x20] sm:$0xff]
        %v330 = vld [vmem:[%s309 + $0x28] sm:$0xff]
        %v331 = vld [vmem:[%s309 + $0x30] sm:$0xff]
        %v332 = vld [vmem:[%s309 + $0x38] sm:$0xff]
        %v333 = vld [vmem:[%s309 + $0x40] sm:$0xff]
        %v334 = vld [vmem:[%s309 + $0x48] sm:$0xff]
        %v335 = vld [vmem:[%s309 + $0x50] sm:$0xff]
        %v336 = vld [vmem:[%s309 + $0x58] sm:$0xff]
        %v337 = vld [vmem:[%s309 + $0x60] sm:$0xff]
        %v338 = vld [vmem:[%s309 + $0x68] sm:$0xff]
        %v339 = vld [vmem:[%s309 + $0x70] sm:$0xff]
        %v340 = vld [vmem:[%s309 + $0x78] sm:$0xff]
        %v341 = vld [vmem:[%s315] sm:$0xf]
        %v342 = vld [vmem:[%s315 + $0x4] sm:$0xf]
        %v343 = vld [vmem:[%s315 + $0x8] sm:$0xf]
        %v344 = vld [vmem:[%s315 + $0xc] sm:$0xf]
        %v345 = vld [vmem:[%s315 + $0x10] sm:$0xf]
        %v346 = vld [vmem:[%s315 + $0x14] sm:$0xf]
        %v347 = vld [vmem:[%s315 + $0x18] sm:$0xf]
        %v348 = vld [vmem:[%s315 + $0x1c] sm:$0xf]
        %v349 = vld [vmem:[%s315 + $0x20] sm:$0xf]
        %v350 = vld [vmem:[%s315 + $0x24] sm:$0xf]
        %v351 = vld [vmem:[%s315 + $0x28] sm:$0xf]
        %v352 = vld [vmem:[%s315 + $0x2c] sm:$0xf]
        %v353 = vld [vmem:[%s315 + $0x30] sm:$0xf]
        %v354 = vld [vmem:[%s315 + $0x34] sm:$0xf]
        %v355 = vld [vmem:[%s315 + $0x38] sm:$0xf]
        %v356 = vld [vmem:[%s315 + $0x3c] sm:$0xf]
        %v357 = vpack.c.bf16 %v326, %v325
        %v358 = vpack.c.bf16 %v328, %v327
        %v359 = vpack.c.bf16 %v330, %v329
        %v360 = vpack.c.bf16 %v332, %v331
        %v361 = vpack.c.bf16 %v334, %v333
        %v362 = vpack.c.bf16 %v336, %v335
        %v363 = vpack.c.bf16 %v338, %v337
        %v364 = vpack.c.bf16 %v340, %v339
        %v365 = vld [vmem:[%s3] sm:$0xf]
        %v366 = vld [vmem:[%s3 + $0x4] sm:$0xf]
        %v367 = vld [vmem:[%s3 + $0x8] sm:$0xf]
        %v368 = vld [vmem:[%s3 + $0xc] sm:$0xf]
        %v369 = vld [vmem:[%s4] sm:$0x1]
        %v371 = vlaneseq
        %v372 = vshrl.u32 %v371, 7
        %v373 = vsub.s32 0, %v372
        %v374 = vrot.slane %v369, %v373
        %v380 = vunpack.c.l.b16 %v365
        %v381 = vunpack.c.l.b16 %v366
        %v382 = vunpack.c.l.b16 %v367
        %v383 = vunpack.c.l.b16 %v368
        %v384 = vpack.c.b16 %v381, %v380
        %v385 = vpack.c.b16 %v383, %v382
        %vm388 = vcmask 261120
        %v390 = vsel %vm388, %v357, 0
        %v393 = vsel %vm388, %v358, 0
        %v396 = vsel %vm388, %v359, 0
        %v399 = vsel %vm388, %v360, 0
        %v402 = vsel %vm388, %v361, 0
        %v405 = vsel %vm388, %v362, 0
        %v408 = vsel %vm388, %v363, 0
        %v411 = vsel %vm388, %v364, 0
        %413 = vmatprep.subr.bf16.mxu0 0
        %414 = vmatpush1.bf16.msra.mxu0 %v384
        %415 = vmatprep.subr.bf16.mxu0 0
        %416 = vmatpush1.bf16.msra.mxu0 %v385
        %417 = vmatprep.subr.bf16.mxu0 0
        %418 = vmatpush1.bf16.msra.mxu0 0
        %419 = vmatprep.subr.bf16.mxu0 0
        %420 = vmatpush1.bf16.msra.mxu0 0
        %421 = vmatprep.subr.bf16.mxu0 0
        %422 = vmatpush1.bf16.msra.mxu0 0
        %423 = vmatprep.subr.bf16.mxu0 0
        %424 = vmatpush1.bf16.msra.mxu0 0
        %425 = vmatprep.subr.bf16.mxu0 0
        %426 = vmatpush1.bf16.msra.mxu0 0
        %427 = vmatprep.subr.bf16.mxu0 0
        %428 = vmatpush1.bf16.msra.mxu0 0
        %429 = vmatprep.subr.bf16.mxu0 0
        %430 = vmatpush1.bf16.msra.mxu0 0
        %431 = vmatprep.subr.bf16.mxu0 0
        %432 = vmatpush1.bf16.msra.mxu0 0
        %433 = vmatprep.subr.bf16.mxu0 0
        %434 = vmatpush1.bf16.msra.mxu0 0
        %435 = vmatprep.subr.bf16.mxu0 0
        %436 = vmatpush1.bf16.msra.mxu0 0
        %437 = vmatprep.subr.bf16.mxu0 0
        %438 = vmatpush1.bf16.msra.mxu0 0
        %439 = vmatprep.subr.bf16.mxu0 0
        %440 = vmatpush1.bf16.msra.mxu0 0
        %441 = vmatprep.subr.bf16.mxu0 0
        %442 = vmatpush1.bf16.msra.mxu0 0
        %443 = vmatprep.subr.bf16.mxu0 0
        %444 = vmatpush1.bf16.msra.mxu0 0
        %445 = vmatprep.mubr.bf16.mxu0 0
        %446 = vmatmul.mubr.bf16.gmra.mrb[0].mxu0 %v390
        %v447 = vpop.f32.mrb[0].mxu0
        %v448 = vadd.f32 %v374, %v447
        %v449 = vpop.f32.mrb[0].mxu0
        %v450 = vpop.f32.mrb[0].mxu0
        %v451 = vadd.f32 %v374, %v450
        %v452 = vpop.f32.mrb[0].mxu0
        %453 = vmatprep.mubr.bf16.mxu0 0
        %454 = vmatmul.mubr.bf16.gmra.mrb[0].mxu0 %v393
        %v455 = vpop.f32.mrb[0].mxu0
        %v456 = vadd.f32 %v374, %v455
        %v457 = vpop.f32.mrb[0].mxu0
        %v458 = vpop.f32.mrb[0].mxu0
        %v459 = vadd.f32 %v374, %v458
        %v460 = vpop.f32.mrb[0].mxu0
        %461 = vmatprep.mubr.bf16.mxu0 0
        %462 = vmatmul.mubr.bf16.gmra.mrb[0].mxu0 %v396
        %v463 = vpop.f32.mrb[0].mxu0
        %v464 = vadd.f32 %v374, %v463
        %v465 = vpop.f32.mrb[0].mxu0
        %v466 = vpop.f32.mrb[0].mxu0
        %v467 = vadd.f32 %v374, %v466
        %v468 = vpop.f32.mrb[0].mxu0
        %469 = vmatprep.mubr.bf16.mxu0 0
        %470 = vmatmul.mubr.bf16.gmra.mrb[0].mxu0 %v399
        %v471 = vpop.f32.mrb[0].mxu0
        %v472 = vadd.f32 %v374, %v471
        %v473 = vpop.f32.mrb[0].mxu0
        %v474 = vpop.f32.mrb[0].mxu0
        %v475 = vadd.f32 %v374, %v474
        %v476 = vpop.f32.mrb[0].mxu0
        %477 = vmatprep.mubr.bf16.mxu0 0
        %478 = vmatmul.mubr.bf16.gmra.mrb[0].mxu0 %v402
        %v479 = vpop.f32.mrb[0].mxu0
        %v480 = vadd.f32 %v374, %v479
        %v481 = vpop.f32.mrb[0].mxu0
        %v482 = vpop.f32.mrb[0].mxu0
        %v483 = vadd.f32 %v374, %v482
        %v484 = vpop.f32.mrb[0].mxu0
        %485 = vmatprep.mubr.bf16.mxu0 0
        %486 = vmatmul.mubr.bf16.gmra.mrb[0].mxu0 %v405
        %v487 = vpop.f32.mrb[0].mxu0
        %v488 = vadd.f32 %v374, %v487
        %v489 = vpop.f32.mrb[0].mxu0
        %v490 = vpop.f32.mrb[0].mxu0
        %v491 = vadd.f32 %v374, %v490
        %v492 = vpop.f32.mrb[0].mxu0
        %493 = vmatprep.mubr.bf16.mxu0 0
        %494 = vmatmul.mubr.bf16.gmra.mrb[0].mxu0 %v408
        %v495 = vpop.f32.mrb[0].mxu0
        %v496 = vadd.f32 %v374, %v495
        %v497 = vpop.f32.mrb[0].mxu0
        %v498 = vpop.f32.mrb[0].mxu0
        %v499 = vadd.f32 %v374, %v498
        %v500 = vpop.f32.mrb[0].mxu0
        %501 = vmatprep.mubr.bf16.mxu0 0
        %502 = vmatmul.mubr.bf16.gmra.mrb[0].mxu0 %v411
        %v503 = vpop.f32.mrb[0].mxu0
        %v504 = vadd.f32 %v374, %v503
        %v505 = vpop.f32.mrb[0].mxu0
        %v506 = vpop.f32.mrb[0].mxu0
        %v507 = vadd.f32 %v374, %v506
        %v508 = vpop.f32.mrb[0].mxu0
        %509 = vdwg.mxu0
        %v510 = vmax.f32 %v448, 0.0
        %v511 = vmax.f32 %v451, 0.0
        %v512 = vmax.f32 %v456, 0.0
        %v513 = vmax.f32 %v459, 0.0
        %v514 = vmax.f32 %v464, 0.0
        %v515 = vmax.f32 %v467, 0.0
        %v516 = vmax.f32 %v472, 0.0
        %v517 = vmax.f32 %v475, 0.0
        %v518 = vmax.f32 %v480, 0.0
        %v519 = vmax.f32 %v483, 0.0
        %v520 = vmax.f32 %v488, 0.0
        %v521 = vmax.f32 %v491, 0.0
        %v522 = vmax.f32 %v496, 0.0
        %v523 = vmax.f32 %v499, 0.0
        %v524 = vmax.f32 %v504, 0.0
        %v525 = vmax.f32 %v507, 0.0
        %v526 = vpack.c.bf16 %v511, %v510
        %v527 = vpack.c.bf16 %v513, %v512
        %v528 = vpack.c.bf16 %v515, %v514
        %v529 = vpack.c.bf16 %v517, %v516
        %v530 = vpack.c.bf16 %v519, %v518
        %v531 = vpack.c.bf16 %v521, %v520
        %v532 = vpack.c.bf16 %v523, %v522
        %v533 = vpack.c.bf16 %v525, %v524
        %v550 = vunpack.c.l.b16 %v341
        %v551 = vunpack.c.l.b16 %v342
        %v552 = vunpack.c.l.b16 %v343
        %v553 = vunpack.c.l.b16 %v344
        %v554 = vunpack.c.l.b16 %v345
        %v555 = vunpack.c.l.b16 %v346
        %v556 = vunpack.c.l.b16 %v347
        %v557 = vunpack.c.l.b16 %v348
        %v558 = vunpack.c.l.b16 %v349
        %v559 = vunpack.c.l.b16 %v350
        %v560 = vunpack.c.l.b16 %v351
        %v561 = vunpack.c.l.b16 %v352
        %v562 = vunpack.c.l.b16 %v353
        %v563 = vunpack.c.l.b16 %v354
        %v564 = vunpack.c.l.b16 %v355
        %v565 = vunpack.c.l.b16 %v356
        %v566 = vpack.c.b16 %v551, %v550
        %v567 = vpack.c.b16 %v553, %v552
        %v568 = vpack.c.b16 %v555, %v554
        %v569 = vpack.c.b16 %v557, %v556
        %v570 = vpack.c.b16 %v559, %v558
        %v571 = vpack.c.b16 %v561, %v560
        %v572 = vpack.c.b16 %v563, %v562
        %v573 = vpack.c.b16 %v565, %v564
        %582 = vmatprep.subr.bf16.mxu0 0
        %583 = vmatpush1.bf16.msra.mxu0 %v526
        %584 = vmatprep.subr.bf16.mxu0 0
        %585 = vmatpush1.bf16.msra.mxu0 %v527
        %586 = vmatprep.subr.bf16.mxu0 0
        %587 = vmatpush1.bf16.msra.mxu0 %v528
        %588 = vmatprep.subr.bf16.mxu0 0
        %589 = vmatpush1.bf16.msra.mxu0 %v529
        %590 = vmatprep.subr.bf16.mxu0 0
        %591 = vmatpush1.bf16.msra.mxu0 %v530
        %592 = vmatprep.subr.bf16.mxu0 0
        %593 = vmatpush1.bf16.msra.mxu0 %v531
        %594 = vmatprep.subr.bf16.mxu0 0
        %595 = vmatpush1.bf16.msra.mxu0 %v532
        %596 = vmatprep.subr.bf16.mxu0 0
        %597 = vmatpush1.bf16.msra.mxu0 %v533
        %598 = vmatprep.subr.bf16.mxu0 0
        %599 = vmatpush1.bf16.msra.mxu0 0
        %600 = vmatprep.subr.bf16.mxu0 0
        %601 = vmatpush1.bf16.msra.mxu0 0
        %602 = vmatprep.subr.bf16.mxu0 0
        %603 = vmatpush1.bf16.msra.mxu0 0
        %604 = vmatprep.subr.bf16.mxu0 0
        %605 = vmatpush1.bf16.msra.mxu0 0
        %606 = vmatprep.subr.bf16.mxu0 0
        %607 = vmatpush1.bf16.msra.mxu0 0
        %608 = vmatprep.subr.bf16.mxu0 0
        %609 = vmatpush1.bf16.msra.mxu0 0
        %610 = vmatprep.subr.bf16.mxu0 0
        %611 = vmatpush1.bf16.msra.mxu0 0
        %612 = vmatprep.subr.bf16.mxu0 0
        %613 = vmatpush1.bf16.msra.mxu0 0
        %614 = vmatprep.mubr.bf16.mxu0 0
        %615 = vmatmul.mubr.bf16.gmra.mrb[0].mxu0 %v566
        %v616 = vpop.f32.mrb[0].mxu0
        %v617 = vadd.f32 0.0, %v616
        %v618 = vpop.f32.mrb[0].mxu0
        %v619 = vpop.f32.mrb[0].mxu0
        %v620 = vadd.f32 0.0, %v619
        %v621 = vpop.f32.mrb[0].mxu0
        %622 = vmatprep.mubr.bf16.mxu0 0
        %623 = vmatmul.mubr.bf16.gmra.mrb[0].mxu0 %v567
        %v624 = vpop.f32.mrb[0].mxu0
        %v625 = vadd.f32 0.0, %v624
        %v626 = vpop.f32.mrb[0].mxu0
        %v627 = vpop.f32.mrb[0].mxu0
        %v628 = vadd.f32 0.0, %v627
        %v629 = vpop.f32.mrb[0].mxu0
        %630 = vmatprep.mubr.bf16.mxu0 0
        %631 = vmatmul.mubr.bf16.gmra.mrb[0].mxu0 %v568
        %v632 = vpop.f32.mrb[0].mxu0
        %v633 = vadd.f32 0.0, %v632
        %v634 = vpop.f32.mrb[0].mxu0
        %v635 = vpop.f32.mrb[0].mxu0
        %v636 = vadd.f32 0.0, %v635
        %v637 = vpop.f32.mrb[0].mxu0
        %638 = vmatprep.mubr.bf16.mxu0 0
        %639 = vmatmul.mubr.bf16.gmra.mrb[0].mxu0 %v569
        %v640 = vpop.f32.mrb[0].mxu0
        %v641 = vadd.f32 0.0, %v640
        %v642 = vpop.f32.mrb[0].mxu0
        %v643 = vpop.f32.mrb[0].mxu0
        %v644 = vadd.f32 0.0, %v643
        %v645 = vpop.f32.mrb[0].mxu0
        %646 = vmatprep.mubr.bf16.mxu0 0
        %647 = vmatmul.mubr.bf16.gmra.mrb[0].mxu0 %v570
        %v648 = vpop.f32.mrb[0].mxu0
        %v649 = vadd.f32 0.0, %v648
        %v650 = vpop.f32.mrb[0].mxu0
        %v651 = vpop.f32.mrb[0].mxu0
        %v652 = vadd.f32 0.0, %v651
        %v653 = vpop.f32.mrb[0].mxu0
        %654 = vmatprep.mubr.bf16.mxu0 0
        %655 = vmatmul.mubr.bf16.gmra.mrb[0].mxu0 %v571
        %v656 = vpop.f32.mrb[0].mxu0
        %v657 = vadd.f32 0.0, %v656
        %v658 = vpop.f32.mrb[0].mxu0
        %v659 = vpop.f32.mrb[0].mxu0
        %v660 = vadd.f32 0.0, %v659
        %v661 = vpop.f32.mrb[0].mxu0
        %662 = vmatprep.mubr.bf16.mxu0 0
        %663 = vmatmul.mubr.bf16.gmra.mrb[0].mxu0 %v572
        %v664 = vpop.f32.mrb[0].mxu0
        %v665 = vadd.f32 0.0, %v664
        %v666 = vpop.f32.mrb[0].mxu0
        %v667 = vpop.f32.mrb[0].mxu0
        %v668 = vadd.f32 0.0, %v667
        %v669 = vpop.f32.mrb[0].mxu0
        %670 = vmatprep.mubr.bf16.mxu0 0
        %671 = vmatmul.mubr.bf16.gmra.mrb[0].mxu0 %v573
        %v672 = vpop.f32.mrb[0].mxu0
        %v673 = vadd.f32 0.0, %v672
        %v674 = vpop.f32.mrb[0].mxu0
        %v675 = vpop.f32.mrb[0].mxu0
        %v676 = vadd.f32 0.0, %v675
        %v677 = vpop.f32.mrb[0].mxu0
        %678 = vdwg.mxu0
        %v679 = vadd.f32 %v325, %v617
        %v680 = vadd.f32 %v326, %v620
        %v681 = vadd.f32 %v327, %v625
        %v682 = vadd.f32 %v328, %v628
        %v683 = vadd.f32 %v329, %v633
        %v684 = vadd.f32 %v330, %v636
        %v685 = vadd.f32 %v331, %v641
        %v686 = vadd.f32 %v332, %v644
        %v687 = vadd.f32 %v333, %v649
        %v688 = vadd.f32 %v334, %v652
        %v689 = vadd.f32 %v335, %v657
        %v690 = vadd.f32 %v336, %v660
        %v691 = vadd.f32 %v337, %v665
        %v692 = vadd.f32 %v338, %v668
        %v693 = vadd.f32 %v339, %v673
        %v694 = vadd.f32 %v340, %v676
        %v695 = vpack.c.bf16 %v680, %v679
        %v696 = vpack.c.bf16 %v682, %v681
        %v697 = vpack.c.bf16 %v684, %v683
        %v698 = vpack.c.bf16 %v686, %v685
        %v699 = vpack.c.bf16 %v688, %v687
        %v700 = vpack.c.bf16 %v690, %v689
        %v701 = vpack.c.bf16 %v692, %v691
        %v702 = vpack.c.bf16 %v694, %v693
        %s703 = scalar_lea.vmem %s3, 16
        %v704 = vld [vmem:[%s703] sm:$0xf]
        %v705 = vld [vmem:[%s703 + $0x4] sm:$0xf]
        %v706 = vld [vmem:[%s703 + $0x8] sm:$0xf]
        %v707 = vld [vmem:[%s703 + $0xc] sm:$0xf]
        %s708 = scalar_lea.vmem %s4, 1
        %v709 = vld [vmem:[%s708] sm:$0x1]
        %v711 = vlaneseq
        %v712 = vshrl.u32 %v711, 7
        %v713 = vsub.s32 0, %v712
        %v714 = vrot.slane %v709, %v713
        %v720 = vunpack.c.l.b16 %v704
        %v721 = vunpack.c.l.b16 %v705
        %v722 = vunpack.c.l.b16 %v706
        %v723 = vunpack.c.l.b16 %v707
        %v724 = vpack.c.b16 %v721, %v720
        %v725 = vpack.c.b16 %v723, %v722
        %v729 = vsel %vm388, %v695, 0
        %v732 = vsel %vm388, %v696, 0
        %v735 = vsel %vm388, %v697, 0
        %v738 = vsel %vm388, %v698, 0
        %v741 = vsel %vm388, %v699, 0
        %v744 = vsel %vm388, %v700, 0
        %v747 = vsel %vm388, %v701, 0
        %v750 = vsel %vm388, %v702, 0
        %752 = vmatprep.subr.bf16.mxu0 0
        %753 = vmatpush1.bf16.msra.mxu0 %v724
        %754 = vmatprep.subr.bf16.mxu0 0
        %755 = vmatpush1.bf16.msra.mxu0 %v725
        %756 = vmatprep.subr.bf16.mxu0 0
        %757 = vmatpush1.bf16.msra.mxu0 0
        %758 = vmatprep.subr.bf16.mxu0 0
        %759 = vmatpush1.bf16.msra.mxu0 0
        %760 = vmatprep.subr.bf16.mxu0 0
        %761 = vmatpush1.bf16.msra.mxu0 0
        %762 = vmatprep.subr.bf16.mxu0 0
        %763 = vmatpush1.bf16.msra.mxu0 0
        %764 = vmatprep.subr.bf16.mxu0 0
        %765 = vmatpush1.bf16.msra.mxu0 0
        %766 = vmatprep.subr.bf16.mxu0 0
        %767 = vmatpush1.bf16.msra.mxu0 0
        %768 = vmatprep.subr.bf16.mxu0 0
        %769 = vmatpush1.bf16.msra.mxu0 0
        %770 = vmatprep.subr.bf16.mxu0 0
        %771 = vmatpush1.bf16.msra.mxu0 0
        %772 = vmatprep.subr.bf16.mxu0 0
        %773 = vmatpush1.bf16.msra.mxu0 0
        %774 = vmatprep.subr.bf16.mxu0 0
        %775 = vmatpush1.bf16.msra.mxu0 0
        %776 = vmatprep.subr.bf16.mxu0 0
        %777 = vmatpush1.bf16.msra.mxu0 0
        %778 = vmatprep.subr.bf16.mxu0 0
        %779 = vmatpush1.bf16.msra.mxu0 0
        %780 = vmatprep.subr.bf16.mxu0 0
        %781 = vmatpush1.bf16.msra.mxu0 0
        %782 = vmatprep.subr.bf16.mxu0 0
        %783 = vmatpush1.bf16.msra.mxu0 0
        %784 = vmatprep.mubr.bf16.mxu0 0
        %785 = vmatmul.mubr.bf16.gmra.mrb[0].mxu0 %v729
        %v786 = vpop.f32.mrb[0].mxu0
        %v787 = vadd.f32 %v714, %v786
        %v788 = vpop.f32.mrb[0].mxu0
        %v789 = vpop.f32.mrb[0].mxu0
        %v790 = vadd.f32 %v714, %v789
        %v791 = vpop.f32.mrb[0].mxu0
        %792 = vmatprep.mubr.bf16.mxu0 0
        %793 = vmatmul.mubr.bf16.gmra.mrb[0].mxu0 %v732
        %v794 = vpop.f32.mrb[0].mxu0
        %v795 = vadd.f32 %v714, %v794
        %v796 = vpop.f32.mrb[0].mxu0
        %v797 = vpop.f32.mrb[0].mxu0
        %v798 = vadd.f32 %v714, %v797
        %v799 = vpop.f32.mrb[0].mxu0
        %800 = vmatprep.mubr.bf16.mxu0 0
        %801 = vmatmul.mubr.bf16.gmra.mrb[0].mxu0 %v735
        %v802 = vpop.f32.mrb[0].mxu0
        %v803 = vadd.f32 %v714, %v802
        %v804 = vpop.f32.mrb[0].mxu0
        %v805 = vpop.f32.mrb[0].mxu0
        %v806 = vadd.f32 %v714, %v805
        %v807 = vpop.f32.mrb[0].mxu0
        %808 = vmatprep.mubr.bf16.mxu0 0
        %809 = vmatmul.mubr.bf16.gmra.mrb[0].mxu0 %v738
        %v810 = vpop.f32.mrb[0].mxu0
        %v811 = vadd.f32 %v714, %v810
        %v812 = vpop.f32.mrb[0].mxu0
        %v813 = vpop.f32.mrb[0].mxu0
        %v814 = vadd.f32 %v714, %v813
        %v815 = vpop.f32.mrb[0].mxu0
        %816 = vmatprep.mubr.bf16.mxu0 0
        %817 = vmatmul.mubr.bf16.gmra.mrb[0].mxu0 %v741
        %v818 = vpop.f32.mrb[0].mxu0
        %v819 = vadd.f32 %v714, %v818
        %v820 = vpop.f32.mrb[0].mxu0
        %v821 = vpop.f32.mrb[0].mxu0
        %v822 = vadd.f32 %v714, %v821
        %v823 = vpop.f32.mrb[0].mxu0
        %824 = vmatprep.mubr.bf16.mxu0 0
        %825 = vmatmul.mubr.bf16.gmra.mrb[0].mxu0 %v744
        %v826 = vpop.f32.mrb[0].mxu0
        %v827 = vadd.f32 %v714, %v826
        %v828 = vpop.f32.mrb[0].mxu0
        %v829 = vpop.f32.mrb[0].mxu0
        %v830 = vadd.f32 %v714, %v829
        %v831 = vpop.f32.mrb[0].mxu0
        %832 = vmatprep.mubr.bf16.mxu0 0
        %833 = vmatmul.mubr.bf16.gmra.mrb[0].mxu0 %v747
        %v834 = vpop.f32.mrb[0].mxu0
        %v835 = vadd.f32 %v714, %v834
        %v836 = vpop.f32.mrb[0].mxu0
        %v837 = vpop.f32.mrb[0].mxu0
        %v838 = vadd.f32 %v714, %v837
        %v839 = vpop.f32.mrb[0].mxu0
        %840 = vmatprep.mubr.bf16.mxu0 0
        %841 = vmatmul.mubr.bf16.gmra.mrb[0].mxu0 %v750
        %v842 = vpop.f32.mrb[0].mxu0
        %v843 = vadd.f32 %v714, %v842
        %v844 = vpop.f32.mrb[0].mxu0
        %v845 = vpop.f32.mrb[0].mxu0
        %v846 = vadd.f32 %v714, %v845
        %v847 = vpop.f32.mrb[0].mxu0
        %848 = vdwg.mxu0
        %v849 = vmax.f32 %v787, 0.0
        %v850 = vmax.f32 %v790, 0.0
        %v851 = vmax.f32 %v795, 0.0
        %v852 = vmax.f32 %v798, 0.0
        %v853 = vmax.f32 %v803, 0.0
        %v854 = vmax.f32 %v806, 0.0
        %v855 = vmax.f32 %v811, 0.0
        %v856 = vmax.f32 %v814, 0.0
        %v857 = vmax.f32 %v819, 0.0
        %v858 = vmax.f32 %v822, 0.0
        %v859 = vmax.f32 %v827, 0.0
        %v860 = vmax.f32 %v830, 0.0
        %v861 = vmax.f32 %v835, 0.0
        %v862 = vmax.f32 %v838, 0.0
        %v863 = vmax.f32 %v843, 0.0
        %v864 = vmax.f32 %v846, 0.0
        %v865 = vpack.c.bf16 %v850, %v849
        %v866 = vpack.c.bf16 %v852, %v851
        %v867 = vpack.c.bf16 %v854, %v853
        %v868 = vpack.c.bf16 %v856, %v855
        %v869 = vpack.c.bf16 %v858, %v857
        %v870 = vpack.c.bf16 %v860, %v859
        %v871 = vpack.c.bf16 %v862, %v861
        %v872 = vpack.c.bf16 %v864, %v863
        %873 = vmatprep.subr.bf16.mxu0 0
        %874 = vmatpush1.bf16.msra.mxu0 %v865
        %875 = vmatprep.subr.bf16.mxu0 0
        %876 = vmatpush1.bf16.msra.mxu0 %v866
        %877 = vmatprep.subr.bf16.mxu0 0
        %878 = vmatpush1.bf16.msra.mxu0 %v867
        %879 = vmatprep.subr.bf16.mxu0 0
        %880 = vmatpush1.bf16.msra.mxu0 %v868
        %881 = vmatprep.subr.bf16.mxu0 0
        %882 = vmatpush1.bf16.msra.mxu0 %v869
        %883 = vmatprep.subr.bf16.mxu0 0
        %884 = vmatpush1.bf16.msra.mxu0 %v870
        %885 = vmatprep.subr.bf16.mxu0 0
        %886 = vmatpush1.bf16.msra.mxu0 %v871
        %887 = vmatprep.subr.bf16.mxu0 0
        %888 = vmatpush1.bf16.msra.mxu0 %v872
        %889 = vmatprep.subr.bf16.mxu0 0
        %890 = vmatpush1.bf16.msra.mxu0 0
        %891 = vmatprep.subr.bf16.mxu0 0
        %892 = vmatpush1.bf16.msra.mxu0 0
        %893 = vmatprep.subr.bf16.mxu0 0
        %894 = vmatpush1.bf16.msra.mxu0 0
        %895 = vmatprep.subr.bf16.mxu0 0
        %896 = vmatpush1.bf16.msra.mxu0 0
        %897 = vmatprep.subr.bf16.mxu0 0
        %898 = vmatpush1.bf16.msra.mxu0 0
        %899 = vmatprep.subr.bf16.mxu0 0
        %900 = vmatpush1.bf16.msra.mxu0 0
        %901 = vmatprep.subr.bf16.mxu0 0
        %902 = vmatpush1.bf16.msra.mxu0 0
        %903 = vmatprep.subr.bf16.mxu0 0
        %904 = vmatpush1.bf16.msra.mxu0 0
        %905 = vmatprep.mubr.bf16.mxu0 0
        %906 = vmatmul.mubr.bf16.gmra.mrb[0].mxu0 %v566
        %v907 = vpop.f32.mrb[0].mxu0
        %v908 = vadd.f32 0.0, %v907
        %v909 = vpop.f32.mrb[0].mxu0
        %v910 = vpop.f32.mrb[0].mxu0
        %v911 = vadd.f32 0.0, %v910
        %v912 = vpop.f32.mrb[0].mxu0
        %913 = vmatprep.mubr.bf16.mxu0 0
        %914 = vmatmul.mubr.bf16.gmra.mrb[0].mxu0 %v567
        %v915 = vpop.f32.mrb[0].mxu0
        %v916 = vadd.f32 0.0, %v915
        %v917 = vpop.f32.mrb[0].mxu0
        %v918 = vpop.f32.mrb[0].mxu0
        %v919 = vadd.f32 0.0, %v918
        %v920 = vpop.f32.mrb[0].mxu0
        %921 = vmatprep.mubr.bf16.mxu0 0
        %922 = vmatmul.mubr.bf16.gmra.mrb[0].mxu0 %v568
        %v923 = vpop.f32.mrb[0].mxu0
        %v924 = vadd.f32 0.0, %v923
        %v925 = vpop.f32.mrb[0].mxu0
        %v926 = vpop.f32.mrb[0].mxu0
        %v927 = vadd.f32 0.0, %v926
        %v928 = vpop.f32.mrb[0].mxu0
        %929 = vmatprep.mubr.bf16.mxu0 0
        %930 = vmatmul.mubr.bf16.gmra.mrb[0].mxu0 %v569
        %v931 = vpop.f32.mrb[0].mxu0
        %v932 = vadd.f32 0.0, %v931
        %v933 = vpop.f32.mrb[0].mxu0
        %v934 = vpop.f32.mrb[0].mxu0
        %v935 = vadd.f32 0.0, %v934
        %v936 = vpop.f32.mrb[0].mxu0
        %937 = vmatprep.mubr.bf16.mxu0 0
        %938 = vmatmul.mubr.bf16.gmra.mrb[0].mxu0 %v570
        %v939 = vpop.f32.mrb[0].mxu0
        %v940 = vadd.f32 0.0, %v939
        %v941 = vpop.f32.mrb[0].mxu0
        %v942 = vpop.f32.mrb[0].mxu0
        %v943 = vadd.f32 0.0, %v942
        %v944 = vpop.f32.mrb[0].mxu0
        %945 = vmatprep.mubr.bf16.mxu0 0
        %946 = vmatmul.mubr.bf16.gmra.mrb[0].mxu0 %v571
        %v947 = vpop.f32.mrb[0].mxu0
        %v948 = vadd.f32 0.0, %v947
        %v949 = vpop.f32.mrb[0].mxu0
        %v950 = vpop.f32.mrb[0].mxu0
        %v951 = vadd.f32 0.0, %v950
        %v952 = vpop.f32.mrb[0].mxu0
        %953 = vmatprep.mubr.bf16.mxu0 0
        %954 = vmatmul.mubr.bf16.gmra.mrb[0].mxu0 %v572
        %v955 = vpop.f32.mrb[0].mxu0
        %v956 = vadd.f32 0.0, %v955
        %v957 = vpop.f32.mrb[0].mxu0
        %v958 = vpop.f32.mrb[0].mxu0
        %v959 = vadd.f32 0.0, %v958
        %v960 = vpop.f32.mrb[0].mxu0
        %961 = vmatprep.mubr.bf16.mxu0 0
        %962 = vmatmul.mubr.bf16.gmra.mrb[0].mxu0 %v573
        %v963 = vpop.f32.mrb[0].mxu0
        %v964 = vadd.f32 0.0, %v963
        %v965 = vpop.f32.mrb[0].mxu0
        %v966 = vpop.f32.mrb[0].mxu0
        %v967 = vadd.f32 0.0, %v966
        %v968 = vpop.f32.mrb[0].mxu0
        %969 = vdwg.mxu0
        %v970 = vadd.f32 %v679, %v908
        %v971 = vadd.f32 %v680, %v911
        %v972 = vadd.f32 %v681, %v916
        %v973 = vadd.f32 %v682, %v919
        %v974 = vadd.f32 %v683, %v924
        %v975 = vadd.f32 %v684, %v927
        %v976 = vadd.f32 %v685, %v932
        %v977 = vadd.f32 %v686, %v935
        %v978 = vadd.f32 %v687, %v940
        %v979 = vadd.f32 %v688, %v943
        %v980 = vadd.f32 %v689, %v948
        %v981 = vadd.f32 %v690, %v951
        %v982 = vadd.f32 %v691, %v956
        %v983 = vadd.f32 %v692, %v959
        %v984 = vadd.f32 %v693, %v964
        %v985 = vadd.f32 %v694, %v967
        %v986 = vld [vmem:[%s321] sm:$0xf]
        %v987 = vld [vmem:[%s321 + $0x4] sm:$0xf]
        %v988 = vpack.c.bf16 %v971, %v970
        %v989 = vpack.c.bf16 %v973, %v972
        %v990 = vpack.c.bf16 %v975, %v974
        %v991 = vpack.c.bf16 %v977, %v976
        %v992 = vpack.c.bf16 %v979, %v978
        %v993 = vpack.c.bf16 %v981, %v980
        %v994 = vpack.c.bf16 %v983, %v982
        %v995 = vpack.c.bf16 %v985, %v984
        %v998 = vunpack.c.l.b16 %v986
        %v999 = vunpack.c.l.b16 %v987
        %v1000 = vpack.c.b16 %v999, %v998
        %1002 = vmatprep.subr.bf16.mxu0 0
        %1003 = vmatpush1.bf16.msra.mxu0 %v988
        %1004 = vmatprep.subr.bf16.mxu0 0
        %1005 = vmatpush1.bf16.msra.mxu0 %v989
        %1006 = vmatprep.subr.bf16.mxu0 0
        %1007 = vmatpush1.bf16.msra.mxu0 %v990
        %1008 = vmatprep.subr.bf16.mxu0 0
        %1009 = vmatpush1.bf16.msra.mxu0 %v991
        %1010 = vmatprep.subr.bf16.mxu0 0
        %1011 = vmatpush1.bf16.msra.mxu0 %v992
        %1012 = vmatprep.subr.bf16.mxu0 0
        %1013 = vmatpush1.bf16.msra.mxu0 %v993
        %1014 = vmatprep.subr.bf16.mxu0 0
        %1015 = vmatpush1.bf16.msra.mxu0 %v994
        %1016 = vmatprep.subr.bf16.mxu0 0
        %1017 = vmatpush1.bf16.msra.mxu0 %v995
        %1018 = vmatprep.subr.bf16.mxu0 0
        %1019 = vmatpush1.bf16.msra.mxu0 0
        %1020 = vmatprep.subr.bf16.mxu0 0
        %1021 = vmatpush1.bf16.msra.mxu0 0
        %1022 = vmatprep.subr.bf16.mxu0 0
        %1023 = vmatpush1.bf16.msra.mxu0 0
        %1024 = vmatprep.subr.bf16.mxu0 0
        %1025 = vmatpush1.bf16.msra.mxu0 0
        %1026 = vmatprep.subr.bf16.mxu0 0
        %1027 = vmatpush1.bf16.msra.mxu0 0
        %1028 = vmatprep.subr.bf16.mxu0 0
        %1029 = vmatpush1.bf16.msra.mxu0 0
        %1030 = vmatprep.subr.bf16.mxu0 0
        %1031 = vmatpush1.bf16.msra.mxu0 0
        %1032 = vmatprep.subr.bf16.mxu0 0
        %1033 = vmatpush1.bf16.msra.mxu0 0
        %1034 = vmatprep.mubr.bf16.mxu0 0
        %1035 = vmatmul.mubr.bf16.gmra.mrb[0].mxu0 %v1000
        %v1036 = vpop.f32.mrb[0].mxu0
        %v1037 = vadd.f32 0.0, %v1036
        %v1038 = vpop.f32.mrb[0].mxu0
        %v1039 = vpop.f32.mrb[0].mxu0
        %v1040 = vadd.f32 0.0, %v1039
        %v1041 = vpop.f32.mrb[0].mxu0
        %1042 = vdwg.mxu0
        %v1043 = vpack.c.bf16 %v1040, %v1037
        %s1044 = scalar_lea.vmem %s3, 32
        %v1045 = vld [vmem:[%s1044] sm:$0xf]
        %v1046 = vld [vmem:[%s1044 + $0x4] sm:$0xf]
        %v1047 = vld [vmem:[%s1044 + $0x8] sm:$0xf]
        %v1048 = vld [vmem:[%s1044 + $0xc] sm:$0xf]
        %s1049 = scalar_lea.vmem %s4, 2
        %v1050 = vld [vmem:[%s1049] sm:$0x1]
        %v1052 = vlaneseq
        %v1053 = vshrl.u32 %v1052, 7
        %v1054 = vsub.s32 0, %v1053
        %v1055 = vrot.slane %v1050, %v1054
        %v1061 = vunpack.c.l.b16 %v1045
        %v1062 = vunpack.c.l.b16 %v1046
        %v1063 = vunpack.c.l.b16 %v1047
        %v1064 = vunpack.c.l.b16 %v1048
        %v1065 = vpack.c.b16 %v1062, %v1061
        %v1066 = vpack.c.b16 %v1064, %v1063
        %v1070 = vsel %vm388, %v1043, 0
        %1072 = vmatprep.subr.bf16.mxu0 0
        %1073 = vmatpush1.bf16.msra.mxu0 %v1065
        %1074 = vmatprep.subr.bf16.mxu0 0
        %1075 = vmatpush1.bf16.msra.mxu0 %v1066
        %1076 = vmatprep.subr.bf16.mxu0 0
        %1077 = vmatpush1.bf16.msra.mxu0 0
        %1078 = vmatprep.subr.bf16.mxu0 0
        %1079 = vmatpush1.bf16.msra.mxu0 0
        %1080 = vmatprep.subr.bf16.mxu0 0
        %1081 = vmatpush1.bf16.msra.mxu0 0
        %1082 = vmatprep.subr.bf16.mxu0 0
        %1083 = vmatpush1.bf16.msra.mxu0 0
        %1084 = vmatprep.subr.bf16.mxu0 0
        %1085 = vmatpush1.bf16.msra.mxu0 0
        %1086 = vmatprep.subr.bf16.mxu0 0
        %1087 = vmatpush1.bf16.msra.mxu0 0
        %1088 = vmatprep.subr.bf16.mxu0 0
        %1089 = vmatpush1.bf16.msra.mxu0 0
        %1090 = vmatprep.subr.bf16.mxu0 0
        %1091 = vmatpush1.bf16.msra.mxu0 0
        %1092 = vmatprep.subr.bf16.mxu0 0
        %1093 = vmatpush1.bf16.msra.mxu0 0
        %1094 = vmatprep.subr.bf16.mxu0 0
        %1095 = vmatpush1.bf16.msra.mxu0 0
        %1096 = vmatprep.subr.bf16.mxu0 0
        %1097 = vmatpush1.bf16.msra.mxu0 0
        %1098 = vmatprep.subr.bf16.mxu0 0
        %1099 = vmatpush1.bf16.msra.mxu0 0
        %1100 = vmatprep.subr.bf16.mxu0 0
        %1101 = vmatpush1.bf16.msra.mxu0 0
        %1102 = vmatprep.subr.bf16.mxu0 0
        %1103 = vmatpush1.bf16.msra.mxu0 0
        %1104 = vmatprep.mubr.bf16.mxu0 0
        %1105 = vmatmul.mubr.bf16.gmra.mrb[0].mxu0 %v1070
        %v1106 = vpop.f32.mrb[0].mxu0
        %v1107 = vadd.f32 %v1055, %v1106
        %v1108 = vpop.f32.mrb[0].mxu0
        %v1109 = vpop.f32.mrb[0].mxu0
        %v1110 = vadd.f32 %v1055, %v1109
        %v1111 = vpop.f32.mrb[0].mxu0
        %1112 = vdwg.mxu0
        %v1113 = vmax.f32 %v1107, 0.0
        %v1114 = vmax.f32 %v1110, 0.0
        %v1115 = vpack.c.bf16 %v1114, %v1113
        %s1116 = scalar_lea.vmem %s3, 48
        %v1117 = vld [vmem:[%s1116] sm:$0xf]
        %v1118 = vld [vmem:[%s1116 + $0x4] sm:$0xf]
        %v1119 = vld [vmem:[%s1116 + $0x8] sm:$0xf]
        %v1120 = vld [vmem:[%s1116 + $0xc] sm:$0xf]
        %s1121 = scalar_lea.vmem %s4, 3
        %v1122 = vld [vmem:[%s1121] sm:$0x1]
        %v1124 = vlaneseq
        %v1125 = vshrl.u32 %v1124, 7
        %v1126 = vsub.s32 0, %v1125
        %v1127 = vrot.slane %v1122, %v1126
        %v1133 = vunpack.c.l.b16 %v1117
        %v1134 = vunpack.c.l.b16 %v1118
        %v1135 = vunpack.c.l.b16 %v1119
        %v1136 = vunpack.c.l.b16 %v1120
        %v1137 = vpack.c.b16 %v1134, %v1133
        %v1138 = vpack.c.b16 %v1136, %v1135
        %v1142 = vsel %vm388, %v1115, 0
        %1144 = vmatprep.subr.bf16.mxu0 0
        %1145 = vmatpush1.bf16.msra.mxu0 %v1137
        %1146 = vmatprep.subr.bf16.mxu0 0
        %1147 = vmatpush1.bf16.msra.mxu0 %v1138
        %1148 = vmatprep.subr.bf16.mxu0 0
        %1149 = vmatpush1.bf16.msra.mxu0 0
        %1150 = vmatprep.subr.bf16.mxu0 0
        %1151 = vmatpush1.bf16.msra.mxu0 0
        %1152 = vmatprep.subr.bf16.mxu0 0
        %1153 = vmatpush1.bf16.msra.mxu0 0
        %1154 = vmatprep.subr.bf16.mxu0 0
        %1155 = vmatpush1.bf16.msra.mxu0 0
        %1156 = vmatprep.subr.bf16.mxu0 0
        %1157 = vmatpush1.bf16.msra.mxu0 0
        %1158 = vmatprep.subr.bf16.mxu0 0
        %1159 = vmatpush1.bf16.msra.mxu0 0
        %1160 = vmatprep.subr.bf16.mxu0 0
        %1161 = vmatpush1.bf16.msra.mxu0 0
        %1162 = vmatprep.subr.bf16.mxu0 0
        %1163 = vmatpush1.bf16.msra.mxu0 0
        %1164 = vmatprep.subr.bf16.mxu0 0
        %1165 = vmatpush1.bf16.msra.mxu0 0
        %1166 = vmatprep.subr.bf16.mxu0 0
        %1167 = vmatpush1.bf16.msra.mxu0 0
        %1168 = vmatprep.subr.bf16.mxu0 0
        %1169 = vmatpush1.bf16.msra.mxu0 0
        %1170 = vmatprep.subr.bf16.mxu0 0
        %1171 = vmatpush1.bf16.msra.mxu0 0
        %1172 = vmatprep.subr.bf16.mxu0 0
        %1173 = vmatpush1.bf16.msra.mxu0 0
        %1174 = vmatprep.subr.bf16.mxu0 0
        %1175 = vmatpush1.bf16.msra.mxu0 0
        %1176 = vmatprep.mubr.bf16.mxu0 0
        %1177 = vmatmul.mubr.bf16.gmra.mrb[0].mxu0 %v1142
        %v1178 = vpop.f32.mrb[0].mxu0
        %v1179 = vadd.f32 %v1127, %v1178
        %v1180 = vpop.f32.mrb[0].mxu0
        %v1181 = vpop.f32.mrb[0].mxu0
        %v1182 = vadd.f32 %v1127, %v1181
        %v1183 = vpop.f32.mrb[0].mxu0
        %1184 = vdwg.mxu0
        %v1185 = vmax.f32 %v1179, 0.0
        %v1186 = vmax.f32 %v1182, 0.0
        %v1187 = vpack.c.bf16 %v1186, %v1185
        %v1188 = vld [vmem:[%s5] sm:$0xf]
        %v1189 = vld [vmem:[%s5 + $0x4] sm:$0xf]
        %v1190 = vld [vmem:[%s5 + $0x8] sm:$0xf]
        %v1191 = vld [vmem:[%s5 + $0xc] sm:$0xf]
        %v1192 = vld [vmem:[%s6] sm:$0x1]
        %v1194 = vlaneseq
        %v1195 = vshrl.u32 %v1194, 7
        %v1196 = vsub.s32 0, %v1195
        %v1197 = vrot.slane %v1192, %v1196
        %v1203 = vunpack.c.l.b16 %v1188
        %v1204 = vunpack.c.l.b16 %v1189
        %v1205 = vunpack.c.l.b16 %v1190
        %v1206 = vunpack.c.l.b16 %v1191
        %v1207 = vpack.c.b16 %v1204, %v1203
        %v1208 = vpack.c.b16 %v1206, %v1205
        %v1212 = vsel %vm388, %v1187, 0
        %1214 = vmatprep.subr.bf16.mxu0 0
        %1215 = vmatpush1.bf16.msra.mxu0 %v1207
        %1216 = vmatprep.subr.bf16.mxu0 0
        %1217 = vmatpush1.bf16.msra.mxu0 %v1208
        %1218 = vmatprep.subr.bf16.mxu0 0
        %1219 = vmatpush1.bf16.msra.mxu0 0
        %1220 = vmatprep.subr.bf16.mxu0 0
        %1221 = vmatpush1.bf16.msra.mxu0 0
        %1222 = vmatprep.subr.bf16.mxu0 0
        %1223 = vmatpush1.bf16.msra.mxu0 0
        %1224 = vmatprep.subr.bf16.mxu0 0
        %1225 = vmatpush1.bf16.msra.mxu0 0
        %1226 = vmatprep.subr.bf16.mxu0 0
        %1227 = vmatpush1.bf16.msra.mxu0 0
        %1228 = vmatprep.subr.bf16.mxu0 0
        %1229 = vmatpush1.bf16.msra.mxu0 0
        %1230 = vmatprep.subr.bf16.mxu0 0
        %1231 = vmatpush1.bf16.msra.mxu0 0
        %1232 = vmatprep.subr.bf16.mxu0 0
        %1233 = vmatpush1.bf16.msra.mxu0 0
        %1234 = vmatprep.subr.bf16.mxu0 0
        %1235 = vmatpush1.bf16.msra.mxu0 0
        %1236 = vmatprep.subr.bf16.mxu0 0
        %1237 = vmatpush1.bf16.msra.mxu0 0
        %1238 = vmatprep.subr.bf16.mxu0 0
        %1239 = vmatpush1.bf16.msra.mxu0 0
        %1240 = vmatprep.subr.bf16.mxu0 0
        %1241 = vmatpush1.bf16.msra.mxu0 0
        %1242 = vmatprep.subr.bf16.mxu0 0
        %1243 = vmatpush1.bf16.msra.mxu0 0
        %1244 = vmatprep.subr.bf16.mxu0 0
        %1245 = vmatpush1.bf16.msra.mxu0 0
        %1246 = vmatprep.mubr.bf16.mxu0 0
        %1247 = vmatmul.mubr.bf16.gmra.mrb[0].mxu0 %v1212
        %v1248 = vpop.f32.mrb[0].mxu0
        %v1249 = vadd.f32 %v1197, %v1248
        %v1250 = vpop.f32.mrb[0].mxu0
        %v1251 = vpop.f32.mrb[0].mxu0
        %v1252 = vadd.f32 %v1197, %v1251
        %v1253 = vpop.f32.mrb[0].mxu0
        %1254 = vdwg.mxu0
        %1255 = vst [vmem:[%s304] sm:$0xff] %v1249
        %1256 = vst [vmem:[%s304 + $0x8] sm:$0xff] %v1252
        %s1257 = sand.u32 %s191, 1
        %s1258 = scalar_lea.sflag [#allocation3], %s1257
        %s1259 = sand.u32 %s191, 1
        %s1260 = smul.addr %s1259, 16
        %s1261 = scalar_lea.vmem [#allocation2], %s1260
        // Predicated region
        $region49: #{tpu_custom_call.1} parent=47 // pred_check
          %p1262 = pneg %p201
        $region50: #{tpu_custom_call.1} parent=47 // pred_check_branch
          %1264 = sbr.rel (%p1262) target = $region52
        $region51: #{tpu_custom_call.1} parent=47 // pred_region
          %s1265 = smul.u32 2, %s21
          %s1267 = ssub.s32 256, 256
          %1268 = vsyncadd %s1258, %s1267
          %s1269 = smul.addr %s1265, 128
          %s1270 = scalar_lea.hbm %s7, %s1269
          %s1271 = sshll.u32 %s1261, 4
          %s1272 = int_to_ptr.vmem [resolvable:$true] %s1271
          %1277 = dma.vmem_to_hbm [thread:$0]  %s1272, 256, %s1270, %s1258, 128, 128, 8
        $region52: #{tpu_custom_call.1} parent=47 // pred_fallthru
          _
      $region48: #{tpu_custom_call.1} parent=5 // pred_fallthru
        _
      %p1278 = scmp.le.s32.totalorder 2, %s16
      // Predicated region
      $region53: #{tpu_custom_call.1} parent=5 // pred_check
        %p1279 = pneg %p1278
      $region54: #{tpu_custom_call.1} parent=5 // pred_check_branch
        %1281 = sbr.rel (%p1279) target = $region56
      $region55: #{tpu_custom_call.1} parent=5 // pred_region
        %s1282 = ssub.s32 %s16, 2
        // Predicated region
        $region57: #{tpu_custom_call.1} parent=55 // pred_check
          %p1283 = pneg %p207
        $region58: #{tpu_custom_call.1} parent=55 // pred_check_branch
          %1285 = sbr.rel (%p1283) target = $region60
        $region59: #{tpu_custom_call.1} parent=55 // pred_region
          %s1286 = sand.u32 %s192, 1
          %s1287 = scalar_lea.sflag [#allocation3], %s1286
          %s1288 = sand.u32 %s192, 1
          %s1289 = smul.addr %s1288, 16
          %s1290 = scalar_lea.vmem [#allocation2], %s1289
          %1291 = dma.done %s1287, 256
        $region60: #{tpu_custom_call.1} parent=55 // pred_fallthru
          _
      $region56: #{tpu_custom_call.1} parent=5 // pred_fallthru
        _
    $region6: #{tpu_custom_call.1} parent=1 // loop_footer
      %s20 = sadd.s32 1, %s16
    $region7: #{tpu_custom_call.1} parent=1 // loop_footer_branch
      %15 = sbr.rel target = $region3
    $region8: #{tpu_custom_call.1} parent=1 // loop_exit
      _
    %1292 = vsyncpa [#allocation3], 1
    %s1293 = scalar_lea.sflag [#allocation3], 1
    %1294 = vsyncpa %s1293, 1

</llo_original>
